<compile_context>
chip_gen: v7x
topology: tpu7x:2x2x1
jax: 0.10.0
libtpu: 0.0.40
codegen_flags: <defaults>
</compile_context>

<pallas_src>
import jax
import jax.numpy as jnp
from jax.experimental import pallas as pl
from jax.experimental.pallas import tpu as pltpu

SMALL_N = 1024          # below this (and not forced), skip Pallas entirely
LANES = 128             # lane width
TILE_ROWS = 8           # sublane quantum -> rows padded to a multiple of 8
MAX_BLOCK_ROWS = 1024   # 1024 x 128 f32 = 512 KiB per operand per grid step


def _round_up(x: int, m: int) -> int:
    return (x + m - 1) // m * m


def _fixnet_kernel(p_ref, v_ref, o_ref):
    """p_ref: VMEM f32[8, 128] lane-parity parameter tile
         row 0: w_self = [w00', w11', w00', w11', ...]
         row 1: w_next = [w01',   0 , w01',   0 , ...]  (x lanes take y from lane+1)
         row 2: w_prev = [  0 , w10',   0 , w10', ...]  (y lanes take x from lane-1)
         row 3: bias   = [ b0',  b1',  b0',  b1', ...]
       v_ref / o_ref: VMEM f32[block_rows, 128], interleaved x,y,x,y,... coords."""
    v = v_ref[...]                                  # (block_rows, 128)
    w_self = p_ref[0:1, :]                          # (1, 128) -> sublane broadcast
    w_next = p_ref[1:2, :]
    w_prev = p_ref[2:3, :]
    bias = p_ref[3:4, :]
    nxt = pltpu.roll(v, LANES - 1, axis=1)          # lane i <- v[i+1] (even-lane partner)
    prv = pltpu.roll(v, 1, axis=1)                  # lane i <- v[i-1] (odd-lane partner)
    # 2x2 linear + ReLU entirely on VPU/XLU; wrong-direction partners are
    # multiplied by zero weights, so the lane wrap-around is harmless.
    o_ref[...] = jnp.maximum(v * w_self + nxt * w_next + prv * w_prev + bias, 0.0)


def fixnet_forward(x, weight, bias, gui_width, gui_height, use_kernel=None):
    """x: (N, 2) or (2,) f32 screen coords; weight: (2, 2) f32; bias: (2,) f32."""
    gui_width = float(gui_width)
    gui_height = float(gui_height)
    # Scale folding through ReLU is only valid for strictly positive scales.
    assert gui_width > 0.0 and gui_height > 0.0, "gui dims must be positive"

    squeeze = (x.ndim == 1)
    pts = jnp.atleast_2d(x).astype(jnp.float32)                    # (N, 2)
    n = pts.shape[0]

    # Fold normalize/denormalize + bias into the 2x2 weight (host side, once).
    s = jnp.array([gui_width, gui_height], jnp.float32)
    w_f = (weight.astype(jnp.float32) * s[:, None]) / s[None, :]   # (2, 2)
    b_f = bias.astype(jnp.float32) * s                             # (2,)

    if use_kernel is None:
        use_kernel = n >= SMALL_N
    if not use_kernel:
        # Tiny batch: plain fused XLA beats any kernel launch + padding.
        out = jnp.maximum(pts @ w_f.T + b_f, 0.0)
        return out[0] if squeeze else out

    # ---- Pallas path: operate directly on the interleaved (N, 2) layout. ----
    # Lane-parity parameter tile (8, 128): even lanes = x outputs, odd = y.
    even = (jnp.arange(LANES) % 2) == 0
    w_self = jnp.where(even, w_f[0, 0], w_f[1, 1])
    w_next = jnp.where(even, w_f[0, 1], 0.0)
    w_prev = jnp.where(even, 0.0, w_f[1, 0])
    b_lane = jnp.where(even, b_f[0], b_f[1])
    params = jnp.concatenate(
        [jnp.stack([w_self, w_next, w_prev, b_lane]),
         jnp.zeros((4, LANES), jnp.float32)], axis=0)              # (8, 128)

    # Geometry: flat interleaved stream -> (rows, 128) lane-dense tiles.
    rows = _round_up(n * 2, TILE_ROWS * LANES) // LANES            # multiple of 8
    # <= 512 KiB per step, >= 2 "parallel" steps whenever possible (v7x megacore).
    block_rows = min(MAX_BLOCK_ROWS, _round_up((rows + 1) // 2, TILE_ROWS))
    rows_pad = _round_up(rows, block_rows)
    grid_steps = rows_pad // block_rows

    flat = pts.reshape(-1)                                         # free (row-major)
    flat = jnp.pad(flat, (0, rows_pad * LANES - n * 2))            # only copy; 0-width if aligned
    tiles = flat.reshape(rows_pad, LANES)                          # free

    out_tiles = pl.pallas_call(
        _fixnet_kernel,
        out_shape=jax.ShapeDtypeStruct((rows_pad, LANES), jnp.float32),
        grid=(grid_steps,),
        in_specs=[
            pl.BlockSpec((8, LANES), lambda t: (0, 0)),            # params stay resident
            pl.BlockSpec((block_rows, LANES), lambda t: (t, 0)),
        ],
        out_specs=pl.BlockSpec((block_rows, LANES), lambda t: (t, 0)),
        compiler_params=pltpu.CompilerParams(
            dimension_semantics=("parallel",)),
    )(params, tiles)

    # Padded tail computes relu(b') garbage; contiguous leading-dim slice drops it.
    result = out_tiles.reshape(-1)[: n * 2].reshape(n, 2)
    return result[0] if squeeze else result


if __name__ == "__main__":
    gui_width, gui_height = 1920.0, 1080.0
    s = jnp.array([gui_width, gui_height], jnp.float32)

    def reference(pts, weight, bias):
        # Pure-JAX mirror of the PyTorch forward.
        return jnp.maximum((pts / s) @ weight.T + bias, 0.0) * s

    key = jax.random.PRNGKey(0)
    k1, k2, k3, k4, k5 = jax.random.split(key, 5)

    # 1) Module-init parameters (eye weight, zero bias), single (2,) point
    #    (fast path, matches the module's intended single-point usage).
    w_eye = jnp.eye(2, dtype=jnp.float32)
    b_zero = jnp.zeros((2,), jnp.float32)
    x1 = jax.random.uniform(k1, (2,), jnp.float32) * s
    out1 = jax.block_until_ready(
        fixnet_forward(x1, w_eye, b_zero, gui_width, gui_height))
    assert jnp.allclose(out1, reference(x1, w_eye, b_zero),
                        rtol=1e-4, atol=1e-2), (out1, reference(x1, w_eye, b_zero))

    # 2) Odd-sized small batch with arbitrary ("trained") weight/bias, FORCED
    #    through the Pallas kernel -> validates the lane-parity / roll scheme,
    #    the scale fold, and the pad/unpad bookkeeping.
    w_rnd = jax.random.normal(k2, (2, 2), jnp.float32)
    b_rnd = jax.random.normal(k3, (2,), jnp.float32) * 0.1
    x2 = jax.random.uniform(k4, (37, 2), jnp.float32) * s - 0.25 * s
    out2 = jax.block_until_ready(
        fixnet_forward(x2, w_rnd, b_rnd, gui_width, gui_height, use_kernel=True))
    assert jnp.allclose(out2, reference(x2, w_rnd, b_rnd), rtol=1e-4, atol=1e-2)

    # 3) Larger batch: auto path uses the gridded kernel (>= 2 parallel steps).
    x3 = jax.random.uniform(k5, (8192, 2), jnp.float32) * s
    out3 = jax.block_until_ready(
        fixnet_forward(x3, w_rnd, b_rnd, gui_width, gui_height))
    assert jnp.allclose(out3, reference(x3, w_rnd, b_rnd), rtol=1e-4, atol=1e-2)

    print("KERNEL_OK")
</pallas_src>

<mosaic_0001>
module attributes {stable_mosaic.version = 11 : i64} {
  func.func @_fixnet_kernel(%arg0: i32, %arg1: memref<8x128xf32, #tpu.memory_space<vmem>>, %arg2: memref<8x128xf32, #tpu.memory_space<vmem>>, %arg3: memref<8x128xf32, #tpu.memory_space<vmem>>) attributes {dimension_semantics = [#tpu.dimension_semantics<parallel>], iteration_bounds = array<i64: 1>, scalar_prefetch = 0 : i64, scratch_operands = 0 : i64, tpu.core_type = #tpu.core_type<tc>, window_params = [{pipeline_mode = #tpu.pipeline_mode<synchronous>, transform_indices = @transform_0, window_bounds = array<i64: 8, 128>}, {transform_indices = @transform_1, window_bounds = array<i64: 8, 128>}, {transform_indices = @transform_2, window_bounds = array<i64: 8, 128>}]} {
    %c0 = arith.constant 0 : index
    %c0_0 = arith.constant 0 : index
    %0 = vector.load %arg2[%c0, %c0_0] : memref<8x128xf32, #tpu.memory_space<vmem>>, vector<8x128xf32>
    %c0_1 = arith.constant 0 : index
    %c0_2 = arith.constant 0 : index
    %1 = vector.load %arg1[%c0_1, %c0_2] : memref<8x128xf32, #tpu.memory_space<vmem>>, vector<1x128xf32>
    %c1 = arith.constant 1 : index
    %c0_3 = arith.constant 0 : index
    %2 = vector.load %arg1[%c1, %c0_3] : memref<8x128xf32, #tpu.memory_space<vmem>>, vector<1x128xf32>
    %c2 = arith.constant 2 : index
    %c0_4 = arith.constant 0 : index
    %3 = vector.load %arg1[%c2, %c0_4] : memref<8x128xf32, #tpu.memory_space<vmem>>, vector<1x128xf32>
    %c3 = arith.constant 3 : index
    %c0_5 = arith.constant 0 : index
    %4 = vector.load %arg1[%c3, %c0_5] : memref<8x128xf32, #tpu.memory_space<vmem>>, vector<1x128xf32>
    %c127_i32 = arith.constant 127 : i32
    %5 = tpu.dynamic_rotate %0 by %c127_i32 dim 1 : vector<8x128xf32>, i32 -> vector<8x128xf32>
    %c1_i32 = arith.constant 1 : i32
    %6 = tpu.dynamic_rotate %0 by %c1_i32 dim 1 : vector<8x128xf32>, i32 -> vector<8x128xf32>
    %7 = vector.broadcast %1 : vector<1x128xf32> to vector<8x128xf32>
    %8 = arith.mulf %0, %7 : vector<8x128xf32>
    %9 = vector.broadcast %2 : vector<1x128xf32> to vector<8x128xf32>
    %10 = arith.mulf %5, %9 : vector<8x128xf32>
    %11 = arith.addf %8, %10 : vector<8x128xf32>
    %12 = vector.broadcast %3 : vector<1x128xf32> to vector<8x128xf32>
    %13 = arith.mulf %6, %12 : vector<8x128xf32>
    %14 = arith.addf %11, %13 : vector<8x128xf32>
    %15 = vector.broadcast %4 : vector<1x128xf32> to vector<8x128xf32>
    %16 = arith.addf %14, %15 : vector<8x128xf32>
    %cst = arith.constant 0.000000e+00 : f32
    %17 = vector.broadcast %cst : f32 to vector<8x128xf32>
    %18 = arith.maximumf %16, %17 : vector<8x128xf32>
    %c0_6 = arith.constant 0 : index
    %c0_7 = arith.constant 0 : index
    %19 = vector.load %arg3[%c0_6, %c0_7] : memref<8x128xf32, #tpu.memory_space<vmem>>, vector<8x128xf32>
    tpu.vector_store %arg3[%c0_6, %c0_7], %18 {strides = array<i32>} : memref<8x128xf32, #tpu.memory_space<vmem>>, vector<8x128xf32>,
    return
  }
  func.func @transform_0(%arg0: i32) -> (i32, i32) {
    %c0_i32 = arith.constant 0 : i32
    %c0_i32_0 = arith.constant 0 : i32
    %c0_i32_1 = arith.constant 0 : i32
    return %c0_i32, %c0_i32_0 : i32, i32
  }
  func.func @transform_1(%arg0: i32) -> (i32, i32) {
    %c0_i32 = arith.constant 0 : i32
    %c0_i32_0 = arith.constant 0 : i32
    return %arg0, %c0_i32 : i32, i32
  }
  func.func @transform_2(%arg0: i32) -> (i32, i32) {
    %c0_i32 = arith.constant 0 : i32
    %c0_i32_0 = arith.constant 0 : i32
    return %arg0, %c0_i32 : i32, i32
  }
}

</mosaic_0001>

<llo_original>
// kernel: tpu_custom_call.1
$region0: #{tpu_custom_call.1}
  #allocation0 [shape = 'u32[]', space=smem, size = 0x4, offset = 0x4, fixed_abs, tag = 'smem constant byte address 0x4 - core index']
  #allocation1 [shape = 'u32[144,128]{1,0:T(1,128)}', space=vmem, size = 0x12000, scoped, tag = 'internal scratch']
  %s0 = inlined_call_operand.hbm [shape: f32[8,128], index: 0, kind: input, shape index: {}]
  %s1 = inlined_call_operand.hbm [shape: f32[8,128], index: 1, kind: input, shape index: {}]
  %s2 = inlined_call_operand.hbm [shape: f32[8,128], index: 2, kind: output, shape index: {}]
  %s3 = sld [smem:[#allocation0]]
  $region26: #{tpu_custom_call.1} parent=0
    _
  %s5 = ssub.s32 1, %s3
  %s6 = scalar_select 0, %s5, %s3
  $region1: #{tpu_custom_call.1} parent=0
    #allocation2 [shape = 'u8[4096]{0}', space=vmem, size = 0x1000, scoped, tag = 'input window, operand 0, single buffered']
    #allocation3 [shape = 's32[1]{0}', space=sflag, size = 0x4, scoped, tag = 'scoped memory for tpu_custom_call.1']
    #allocation4 [shape = 's32[1]{0}', space=sflag, size = 0x4, scoped, tag = 'scoped memory for tpu_custom_call.1']
    #allocation5 [shape = 'u8[4096]{0}', space=vmem, size = 0x1000, scoped, tag = 'input window, operand 1, single buffered']
    #allocation6 [shape = 's32[1]{0}', space=sflag, size = 0x4, scoped, tag = 'scoped memory for tpu_custom_call.1']
    #allocation7 [shape = 'u8[4096]{0}', space=vmem, size = 0x1000, scoped, tag = 'output window, operand 0, single buffered']
    %7 = vsyncpa [#allocation3], 0
    %8 = vsyncpa [#allocation6], 0
    %9 = vsyncpa [#allocation4], 0
    // Predicated region
    $region2: #{tpu_custom_call.1} parent=1 // pred_check
      _
    $region3: #{tpu_custom_call.1} parent=1 // pred_check_branch
      %11 = sbr.rel (0) target = $region5
    $region4: #{tpu_custom_call.1} parent=1 // pred_region
      %s13 = ssub.s32 128, 128
      %14 = vsyncadd [#allocation3], %s13
      %s16 = sshll.u32 [#allocation2], 4
      %s17 = int_to_ptr.vmem [resolvable:$true] %s16
      %19 = dma.hbm_to_vmem [thread:$0]  %s0, 128, %s17, [#allocation3]
    $region5: #{tpu_custom_call.1} parent=1 // pred_fallthru
      _
    // Predicated region
    $region6: #{tpu_custom_call.1} parent=1 // pred_check
      _
    $region7: #{tpu_custom_call.1} parent=1 // pred_check_branch
      %21 = sbr.rel (0) target = $region9
    $region8: #{tpu_custom_call.1} parent=1 // pred_region
      %s23 = ssub.s32 128, 128
      %24 = vsyncadd [#allocation6], %s23
      %s26 = sshll.u32 [#allocation5], 4
      %s27 = int_to_ptr.vmem [resolvable:$true] %s26
      %29 = dma.hbm_to_vmem [thread:$0]  %s1, 128, %s27, [#allocation6]
    $region9: #{tpu_custom_call.1} parent=1 // pred_fallthru
      _
    // Predicated region
    $region10: #{tpu_custom_call.1} parent=1 // pred_check
      _
    $region11: #{tpu_custom_call.1} parent=1 // pred_check_branch
      %31 = sbr.rel (0) target = $region13
    $region12: #{tpu_custom_call.1} parent=1 // pred_region
      %32 = dma.done [#allocation3], 128
    $region13: #{tpu_custom_call.1} parent=1 // pred_fallthru
      _
    // Predicated region
    $region14: #{tpu_custom_call.1} parent=1 // pred_check
      _
    $region15: #{tpu_custom_call.1} parent=1 // pred_check_branch
      %34 = sbr.rel (0) target = $region17
    $region16: #{tpu_custom_call.1} parent=1 // pred_region
      %35 = dma.done [#allocation6], 128
    $region17: #{tpu_custom_call.1} parent=1 // pred_fallthru
      _
    %v36 = vld [vmem:[#allocation5] sm:$0xff]
    %v37 = vld [vmem:[#allocation2] sm:$0x1]
    %v38 = vld [vmem:[#allocation2 + $0x1] sm:$0x1]
    %v39 = vld [vmem:[#allocation2 + $0x2] sm:$0x1]
    %v40 = vld [vmem:[#allocation2 + $0x3] sm:$0x1]
    %41 = vrot.lane.b32.xlu0 %v36, 127
    %v42 = vpop.permute.xlu0 %41
    %43 = vrot.lane.b32.xlu0 %v36, 1
    %v44 = vpop.permute.xlu0 %43
    %v45 = vlaneseq
    %v46 = vshrl.u32 %v45, 7
    %v47 = vsub.s32 0, %v46
    %v48 = vrot.slane %v37, %v47
    %v49 = vmul.f32 %v36, %v48
    %v50 = vlaneseq
    %v51 = vshrl.u32 %v50, 7
    %v52 = vsub.s32 0, %v51
    %v53 = vrot.slane %v38, %v52
    %v54 = vmul.f32 %v42, %v53
    %v55 = vadd.f32 %v49, %v54
    %v56 = vlaneseq
    %v57 = vshrl.u32 %v56, 7
    %v58 = vsub.s32 0, %v57
    %v59 = vrot.slane %v39, %v58
    %v60 = vmul.f32 %v44, %v59
    %v61 = vadd.f32 %v55, %v60
    %v62 = vlaneseq
    %v63 = vshrl.u32 %v62, 7
    %v64 = vsub.s32 0, %v63
    %v65 = vrot.slane %v40, %v64
    %v66 = vadd.f32 %v61, %v65
    %v67 = vmax.f32 %v66, 0.0
    %68 = vst [vmem:[#allocation7] sm:$0xff] %v67
    // Predicated region
    $region18: #{tpu_custom_call.1} parent=1 // pred_check
      _
    $region19: #{tpu_custom_call.1} parent=1 // pred_check_branch
      %70 = sbr.rel (0) target = $region21
    $region20: #{tpu_custom_call.1} parent=1 // pred_region
      %s72 = ssub.s32 128, 128
      %73 = vsyncadd [#allocation4], %s72
      %s75 = sshll.u32 [#allocation7], 4
      %s76 = int_to_ptr.vmem [resolvable:$true] %s75
      %78 = dma.vmem_to_hbm [thread:$0]  %s76, 128, %s2, [#allocation4]
    $region21: #{tpu_custom_call.1} parent=1 // pred_fallthru
      _
    // Predicated region
    $region22: #{tpu_custom_call.1} parent=1 // pred_check
      _
    $region23: #{tpu_custom_call.1} parent=1 // pred_check_branch
      %80 = sbr.rel (0) target = $region25
    $region24: #{tpu_custom_call.1} parent=1 // pred_region
      %81 = dma.done [#allocation4], 128
    $region25: #{tpu_custom_call.1} parent=1 // pred_fallthru
      _
    %82 = vsyncpa [#allocation3], 1
    %83 = vsyncpa [#allocation6], 1
    %84 = vsyncpa [#allocation4], 1

</llo_original>
